<compile_context>
chip_gen: v7x
topology: tpu7x:2x2x1
jax: 0.10.0
libtpu: 0.0.40
codegen_flags: <defaults>
</compile_context>

<pallas_src>
import math

import numpy as np
import jax
import jax.numpy as jnp
from jax.experimental import pallas as pl
from jax.experimental.pallas import tpu as pltpu


def _round_up(x, m):
    return (x + m - 1) // m * m


def _softplus(x):
    # numerically stable softplus from basic elementwise ops
    return jnp.maximum(x, 0.0) + jnp.log(1.0 + jnp.exp(-jnp.abs(x)))


# ----------------------------------------------------------------------------
# kernel
# ----------------------------------------------------------------------------
def decoder_kernel(data_ref, mask_ref, zs_ref, logits_ref, mean_z_ref,
                   scale_z_ref, eps_ref,
                   w_ref, bpz_ref, nmean_ref, nstd_ref,
                   samples_ref, stats_ref):
    f_pad = data_ref.shape[1]          # lane-padded feature count
    s_dim = logits_ref.shape[1]        # true s_dim (unpadded)

    # ---- single fused MXU matmul: [z,s] @ [W_loc | W_scale | W_pz] ----------
    zs = zs_ref[...].astype(w_ref.dtype)        # bf16 on v6e/v7x, f32 on v5e
    fused = jnp.dot(zs, w_ref[...], preferred_element_type=jnp.float32)
    loc_pre = fused[:, :f_pad]
    scale_pre = fused[:, f_pad:2 * f_pad]
    pz_loc = fused[:, 2 * f_pad:] + bpz_ref[...]

    # ---- denormalize params (real heads) ------------------------------------
    nmean = nmean_ref[...]
    nstd = nstd_ref[...]
    loc = loc_pre * nstd + nmean
    scale = jnp.maximum(_softplus(scale_pre) * nstd, 1e-6)   # clamp: no log(0)
    inv_scale = pl.reciprocal(scale)                         # reused twice

    # ---- masked Normal log-prob, summed over features (f32 elementwise) -----
    data = data_ref[...]
    mask = mask_ref[...]
    log2pi = jnp.float32(math.log(2.0 * math.pi))
    z_err = (data - loc) * inv_scale
    lp = (jnp.log(inv_scale) - 0.5 * log2pi - 0.5 * jnp.square(z_err)) * mask
    log_prob = jnp.sum(lp, axis=1, keepdims=True)            # [TB, 1]

    # ---- reparameterized Normal(loc, scale) sample ---------------------------
    samples_ref[...] = (loc + scale * eps_ref[...]).astype(samples_ref.dtype)

    # ---- KL(q(s|x) || uniform OneHotCategorical prior) -----------------------
    logits = logits_ref[...]
    mx = jnp.max(logits, axis=1, keepdims=True)
    lse = mx + jnp.log(jnp.sum(jnp.exp(logits - mx), axis=1, keepdims=True))
    logq = logits - lse
    kl_s = jnp.sum(jnp.exp(logq) * (logq + jnp.float32(math.log(float(s_dim)))),
                   axis=1, keepdims=True)                    # [TB, 1]

    # ---- KL(q(z|x) || N(prior_loc_z(s), 1)) ----------------------------------
    sq = scale_z_ref[...]
    mq = mean_z_ref[...]
    klz_el = -jnp.log(sq) + 0.5 * (jnp.square(sq) + jnp.square(mq - pz_loc)) - 0.5
    kl_z = jnp.sum(klz_el, axis=1, keepdims=True)            # [TB, 1]

    # ---- lane-dense packed per-sample stats (one unmasked store) ------------
    # lane 0 = log_prob, lane 1 = kl_s, lane 2 = kl_z, rest = 0
    lane = jax.lax.broadcasted_iota(jnp.int32, stats_ref.shape, 1)
    stats_ref[...] = (jnp.where(lane == 0, log_prob, 0.0)
                      + jnp.where(lane == 1, kl_s, 0.0)
                      + jnp.where(lane == 2, kl_z, 0.0))


# ----------------------------------------------------------------------------
# one-time weight packing (cache the result across calls)
# ----------------------------------------------------------------------------
def pack_decoder_params(params, *, lane_align=128, matmul_dtype=jnp.float32):
    """Fold per-head weights into one fused [Z+S, 2*F_pad + Z_pad] matrix.

    lane_align: 128 is correct for v5e/v6e; use 256 on v7x to fill its
    2x256^2 MXU.  matmul_dtype=jnp.bfloat16 is recommended on v6e/v7x.
    """
    wy = params["wy"]                          # [F, Z, Y]
    n_feat, z_dim, _ = wy.shape
    s_dim = params["wloc_s"].shape[1]
    f_pad = _round_up(n_feat, lane_align)
    z_pad = _round_up(z_dim, lane_align)

    # fold the internal y layer into an effective z -> loc weight
    w_zloc = jnp.einsum("fzy,fy->zf", wy, params["wloc_y"])   # [Z, F]

    k = z_dim + s_dim
    n = 2 * f_pad + z_pad
    w = jnp.zeros((k, n), jnp.float32)
    w = w.at[:z_dim, :n_feat].set(w_zloc)                         # z -> loc
    w = w.at[z_dim:, :n_feat].set(params["wloc_s"].T)             # s -> loc
    w = w.at[z_dim:, f_pad:f_pad + n_feat].set(params["wscale"].T)  # s -> scale
    w = w.at[z_dim:, 2 * f_pad:2 * f_pad + z_dim].set(params["wpz"])  # s -> pz

    bpz = jnp.zeros((1, z_pad), jnp.float32).at[:, :z_dim].set(params["bpz"])
    nmean = jnp.zeros((1, f_pad), jnp.float32).at[:, :n_feat].set(params["nmean"])
    nstd = jnp.ones((1, f_pad), jnp.float32).at[:, :n_feat].set(params["nstd"])

    return {
        "W": w.astype(matmul_dtype),
        "bpz": bpz, "nmean": nmean, "nstd": nstd,
        "n_feat": n_feat, "z_dim": z_dim, "s_dim": s_dim,
        "f_pad": f_pad, "z_pad": z_pad,
    }


# ----------------------------------------------------------------------------
# wrapper
# ----------------------------------------------------------------------------
def decoder_forward(data, mask, samples_z, samples_s, logits_s, mean_z, scale_z,
                    eps, packed, *, batch_tile=128):
    b, n_feat = data.shape
    z_dim, s_dim = packed["z_dim"], packed["s_dim"]
    f_pad, z_pad = packed["f_pad"], packed["z_pad"]

    tb = min(batch_tile, _round_up(b, 8))      # tile rows, multiple of 8
    b_pad = _round_up(b, tb)

    def pad(x, cols, val=0.0):
        return jnp.pad(x, ((0, b_pad - x.shape[0]), (0, cols - x.shape[1])),
                       constant_values=val)

    zs = jnp.concatenate([samples_z, samples_s], axis=1)      # [B, Z+S]

    args = (
        pad(data, f_pad),                                     # data
        pad(mask, f_pad),                                     # mask
        pad(zs, z_dim + s_dim).astype(packed["W"].dtype),     # [z, s]
        pad(logits_s, s_dim),                                 # logits_s
        pad(mean_z, z_pad),                                   # mean_z
        pad(scale_z, z_pad, val=1.0),                         # scale_z (pad=1)
        pad(eps, f_pad),                                      # eps
        packed["W"], packed["bpz"], packed["nmean"], packed["nstd"],
    )

    def tiled(cols):
        return pl.BlockSpec((tb, cols), lambda i: (i, 0))

    def resident(shape):
        return pl.BlockSpec(shape, lambda i: (0, 0))

    in_specs = [
        tiled(f_pad), tiled(f_pad), tiled(z_dim + s_dim), tiled(s_dim),
        tiled(z_pad), tiled(z_pad), tiled(f_pad),
        resident(packed["W"].shape), resident((1, z_pad)),
        resident((1, f_pad)), resident((1, f_pad)),
    ]
    out_shapes = (
        jax.ShapeDtypeStruct((b_pad, f_pad), jnp.float32),    # samples
        jax.ShapeDtypeStruct((b_pad, 128), jnp.float32),      # packed stats
    )
    out_specs = [tiled(f_pad), tiled(128)]

    samples_p, stats_p = pl.pallas_call(
        decoder_kernel,
        grid=(b_pad // tb,),
        in_specs=in_specs,
        out_specs=out_specs,
        out_shape=out_shapes,
        compiler_params=pltpu.CompilerParams(
            dimension_semantics=("parallel",)),   # megacore-shardable on v7x
    )(*args)

    samples = samples_p[:b, :n_feat]
    log_prob = stats_p[:b, 0]
    kl_s = stats_p[:b, 1]
    kl_z = stats_p[:b, 2]
    # scalar loss reduction lives outside the kernel so the grid stays purely
    # parallel (and so batch tiling never changes the denominator).
    loss = -jnp.sum(log_prob - kl_s - kl_z) / (jnp.sum(mask) / n_feat + 1e-6)

    # HivaeOutput equivalent
    return {
        "enc_s": samples_s,
        "enc_z": samples_z,
        "samples": samples,
        "log_prob": log_prob,
        "kl_s": kl_s,
        "kl_z": kl_z,
        "loss": loss,
    }


# ----------------------------------------------------------------------------
# pure-JAX reference (explicit per-head loop) for verification
# ----------------------------------------------------------------------------
def reference_forward(data, mask, samples_z, samples_s, logits_s, mean_z,
                      scale_z, eps, params):
    b, n_feat = data.shape
    locs, scales = [], []
    for f in range(n_feat):
        y_f = samples_z @ params["wy"][f]
        loc_f = y_f @ params["wloc_y"][f] + samples_s @ params["wloc_s"][f]
        scale_f = _softplus(samples_s @ params["wscale"][f])
        locs.append(loc_f)
        scales.append(scale_f)
    loc = jnp.stack(locs, axis=1)
    scale = jnp.stack(scales, axis=1)
    loc = loc * params["nstd"] + params["nmean"]
    scale = jnp.maximum(scale * params["nstd"], 1e-6)

    lp = (-jnp.log(scale) - 0.5 * math.log(2.0 * math.pi)
          - 0.5 * jnp.square((data - loc) / scale)) * mask
    log_prob = jnp.sum(lp, axis=1)
    samples = loc + scale * eps

    logq = jax.nn.log_softmax(logits_s, axis=-1)
    kl_s = jnp.sum(jnp.exp(logq) * (logq + math.log(logits_s.shape[1])), axis=1)

    pz_loc = samples_s @ params["wpz"] + params["bpz"]
    kl_z = jnp.sum(-jnp.log(scale_z)
                   + 0.5 * (jnp.square(scale_z) + jnp.square(mean_z - pz_loc))
                   - 0.5, axis=1)

    loss = -jnp.sum(log_prob - kl_s - kl_z) / (jnp.sum(mask) / n_feat + 1e-6)
    return samples, log_prob, kl_s, kl_z, loss


if __name__ == "__main__":
    B, F, Z, S, Y = 8, 6, 4, 3, 5   # batch, n_variables, z_dim, s_dim, y_dim

    key = jax.random.PRNGKey(0)
    keys = jax.random.split(key, 16)

    # encoder outputs / data (deterministic synthetic)
    data = jax.random.normal(keys[0], (B, F), jnp.float32)
    mask = jax.random.bernoulli(keys[1], 0.8, (B, F)).astype(jnp.float32)
    samples_z = jax.random.normal(keys[2], (B, Z), jnp.float32)
    logits_s = jax.random.normal(keys[3], (B, S), jnp.float32)
    samples_s = jax.nn.one_hot(jnp.argmax(logits_s, axis=-1), S, dtype=jnp.float32)
    mean_z = jax.random.normal(keys[4], (B, Z), jnp.float32)
    scale_z = jnp.abs(jax.random.normal(keys[5], (B, Z), jnp.float32)) + 0.5
    eps = jax.random.normal(keys[6], (B, F), jnp.float32)

    params = {
        "wy":      0.3 * jax.random.normal(keys[7],  (F, Z, Y), jnp.float32),
        "wloc_y":  0.3 * jax.random.normal(keys[8],  (F, Y),    jnp.float32),
        "wloc_s":  0.3 * jax.random.normal(keys[9],  (F, S),    jnp.float32),
        "wscale":  0.3 * jax.random.normal(keys[10], (F, S),    jnp.float32),
        "wpz":     0.3 * jax.random.normal(keys[11], (S, Z),    jnp.float32),
        "bpz":     0.1 * jax.random.normal(keys[12], (1, Z),    jnp.float32),
        "nmean":   jax.random.normal(keys[13], (1, F), jnp.float32),
        "nstd":    jnp.abs(jax.random.normal(keys[14], (1, F), jnp.float32)) + 0.5,
    }

    ref_samples, ref_lp, ref_kls, ref_klz, ref_loss = reference_forward(
        data, mask, samples_z, samples_s, logits_s, mean_z, scale_z, eps, params)

    # f32 MXU path (safe on v5e / v6e / v7x); weights packed ONCE and reused.
    packed_f32 = pack_decoder_params(params)
    out = decoder_forward(data, mask, samples_z, samples_s, logits_s,
                          mean_z, scale_z, eps, packed_f32)
    jax.block_until_ready(out["loss"])

    np.testing.assert_allclose(np.asarray(out["samples"]), np.asarray(ref_samples),
                               rtol=1e-4, atol=1e-4)
    np.testing.assert_allclose(np.asarray(out["log_prob"]), np.asarray(ref_lp),
                               rtol=1e-4, atol=1e-4)
    np.testing.assert_allclose(np.asarray(out["kl_s"]), np.asarray(ref_kls),
                               rtol=1e-4, atol=1e-4)
    np.testing.assert_allclose(np.asarray(out["kl_z"]), np.asarray(ref_klz),
                               rtol=1e-4, atol=1e-4)
    np.testing.assert_allclose(np.asarray(out["loss"]), np.asarray(ref_loss),
                               rtol=1e-4, atol=1e-4)

    # bf16 MXU-input path (recommended on v6e/v7x; elementwise math stays f32).
    packed_bf16 = pack_decoder_params(params, matmul_dtype=jnp.bfloat16)
    out_bf16 = decoder_forward(data, mask, samples_z, samples_s, logits_s,
                               mean_z, scale_z, eps, packed_bf16)
    jax.block_until_ready(out_bf16["loss"])
    np.testing.assert_allclose(np.asarray(out_bf16["loss"]), np.asarray(ref_loss),
                               rtol=1e-1, atol=1e-1)

    # TODO(synk): MTL moo_block (gradnorm/graddrop) only reroutes gradients in
    # training; it is a no-op on the eval forward implemented here.
    print("KERNEL_OK")
</pallas_src>

<mosaic_0001>
module attributes {stable_mosaic.version = 11 : i64} {
  func.func @decoder_kernel(%arg0: i32, %arg1: memref<8x128xf32, #tpu.memory_space<vmem>>, %arg2: memref<8x128xf32, #tpu.memory_space<vmem>>, %arg3: memref<8x7xf32, #tpu.memory_space<vmem>>, %arg4: memref<8x3xf32, #tpu.memory_space<vmem>>, %arg5: memref<8x128xf32, #tpu.memory_space<vmem>>, %arg6: memref<8x128xf32, #tpu.memory_space<vmem>>, %arg7: memref<8x128xf32, #tpu.memory_space<vmem>>, %arg8: memref<7x384xf32, #tpu.memory_space<vmem>>, %arg9: memref<1x128xf32, #tpu.memory_space<vmem>>, %arg10: memref<1x128xf32, #tpu.memory_space<vmem>>, %arg11: memref<1x128xf32, #tpu.memory_space<vmem>>, %arg12: memref<8x128xf32, #tpu.memory_space<vmem>>, %arg13: memref<8x128xf32, #tpu.memory_space<vmem>>) attributes {dimension_semantics = [#tpu.dimension_semantics<parallel>], iteration_bounds = array<i64: 1>, scalar_prefetch = 0 : i64, scratch_operands = 0 : i64, tpu.core_type = #tpu.core_type<tc>, window_params = [{transform_indices = @transform_0, window_bounds = array<i64: 8, 128>}, {transform_indices = @transform_1, window_bounds = array<i64: 8, 128>}, {transform_indices = @transform_2, window_bounds = array<i64: 8, 7>}, {transform_indices = @transform_3, window_bounds = array<i64: 8, 3>}, {transform_indices = @transform_4, window_bounds = array<i64: 8, 128>}, {transform_indices = @transform_5, window_bounds = array<i64: 8, 128>}, {transform_indices = @transform_6, window_bounds = array<i64: 8, 128>}, {pipeline_mode = #tpu.pipeline_mode<synchronous>, transform_indices = @transform_7, window_bounds = array<i64: 7, 384>}, {pipeline_mode = #tpu.pipeline_mode<synchronous>, transform_indices = @transform_8, window_bounds = array<i64: 1, 128>}, {pipeline_mode = #tpu.pipeline_mode<synchronous>, transform_indices = @transform_9, window_bounds = array<i64: 1, 128>}, {pipeline_mode = #tpu.pipeline_mode<synchronous>, transform_indices = @transform_10, window_bounds = array<i64: 1, 128>}, {transform_indices = @transform_11, window_bounds = array<i64: 8, 128>}, {transform_indices = @transform_12, window_bounds = array<i64: 8, 128>}]} {
    %c0 = arith.constant 0 : index
    %c0_0 = arith.constant 0 : index
    %0 = vector.load %arg3[%c0, %c0_0] : memref<8x7xf32, #tpu.memory_space<vmem>>, vector<8x7xf32>
    %c0_1 = arith.constant 0 : index
    %c0_2 = arith.constant 0 : index
    %1 = vector.load %arg8[%c0_1, %c0_2] : memref<7x384xf32, #tpu.memory_space<vmem>>, vector<7x384xf32>
    %cst = arith.constant dense<0.000000e+00> : vector<8x384xf32>
    %2 = tpu.matmul %0, %1, %cst {dimension_numbers = #tpu.dot_dimension_numbers<[1], [0], [0], [1], [0, 0, 1, 1], [], []>} : vector<8x7xf32>, vector<7x384xf32>, vector<8x384xf32> -> vector<8x384xf32>
    %3 = vector.extract_strided_slice %2 {offsets = [0, 0], sizes = [8, 128], strides = [1, 1]} : vector<8x384xf32> to vector<8x128xf32>
    %4 = vector.extract_strided_slice %2 {offsets = [0, 128], sizes = [8, 128], strides = [1, 1]} : vector<8x384xf32> to vector<8x128xf32>
    %5 = vector.extract_strided_slice %2 {offsets = [0, 256], sizes = [8, 128], strides = [1, 1]} : vector<8x384xf32> to vector<8x128xf32>
    %c0_3 = arith.constant 0 : index
    %c0_4 = arith.constant 0 : index
    %6 = vector.load %arg9[%c0_3, %c0_4] : memref<1x128xf32, #tpu.memory_space<vmem>>, vector<1x128xf32>
    %7 = vector.broadcast %6 : vector<1x128xf32> to vector<8x128xf32>
    %8 = arith.addf %5, %7 : vector<8x128xf32>
    %c0_5 = arith.constant 0 : index
    %c0_6 = arith.constant 0 : index
    %9 = vector.load %arg10[%c0_5, %c0_6] : memref<1x128xf32, #tpu.memory_space<vmem>>, vector<1x128xf32>
    %c0_7 = arith.constant 0 : index
    %c0_8 = arith.constant 0 : index
    %10 = vector.load %arg11[%c0_7, %c0_8] : memref<1x128xf32, #tpu.memory_space<vmem>>, vector<1x128xf32>
    %11 = vector.broadcast %10 : vector<1x128xf32> to vector<8x128xf32>
    %12 = arith.mulf %3, %11 : vector<8x128xf32>
    %13 = vector.broadcast %9 : vector<1x128xf32> to vector<8x128xf32>
    %14 = arith.addf %12, %13 : vector<8x128xf32>
    %cst_9 = arith.constant 0.000000e+00 : f32
    %15 = vector.broadcast %cst_9 : f32 to vector<8x128xf32>
    %16 = arith.maximumf %4, %15 : vector<8x128xf32>
    %17 = math.absf %4 : vector<8x128xf32>
    %cst_10 = arith.constant 0.000000e+00 : f32
    %18 = vector.broadcast %cst_10 : f32 to vector<8x128xf32>
    %19 = arith.subf %18, %17 : vector<8x128xf32>
    %20 = math.exp %19 : vector<8x128xf32>
    %cst_11 = arith.constant 1.000000e+00 : f32
    %21 = vector.broadcast %cst_11 : f32 to vector<8x128xf32>
    %22 = arith.addf %21, %20 : vector<8x128xf32>
    %23 = math.log %22 : vector<8x128xf32>
    %24 = arith.addf %16, %23 : vector<8x128xf32>
    %25 = vector.broadcast %10 : vector<1x128xf32> to vector<8x128xf32>
    %26 = arith.mulf %24, %25 : vector<8x128xf32>
    %cst_12 = arith.constant 9.99999997E-7 : f32
    %27 = vector.broadcast %cst_12 : f32 to vector<8x128xf32>
    %28 = arith.maximumf %26, %27 : vector<8x128xf32>
    %29 = tpu.reciprocal %28 : vector<8x128xf32> -> vector<8x128xf32>
    %c0_13 = arith.constant 0 : index
    %c0_14 = arith.constant 0 : index
    %30 = vector.load %arg1[%c0_13, %c0_14] : memref<8x128xf32, #tpu.memory_space<vmem>>, vector<8x128xf32>
    %c0_15 = arith.constant 0 : index
    %c0_16 = arith.constant 0 : index
    %31 = vector.load %arg2[%c0_15, %c0_16] : memref<8x128xf32, #tpu.memory_space<vmem>>, vector<8x128xf32>
    %32 = arith.subf %30, %14 : vector<8x128xf32>
    %33 = arith.mulf %32, %29 : vector<8x128xf32>
    %34 = math.log %29 : vector<8x128xf32>
    %cst_17 = arith.constant 5.000000e-01 : f32
    %cst_18 = arith.constant 1.83787704 : f32
    %35 = arith.mulf %cst_17, %cst_18 : f32
    %36 = vector.broadcast %35 : f32 to vector<8x128xf32>
    %37 = arith.subf %34, %36 : vector<8x128xf32>
    %38 = arith.mulf %33, %33 : vector<8x128xf32>
    %cst_19 = arith.constant 5.000000e-01 : f32
    %39 = vector.broadcast %cst_19 : f32 to vector<8x128xf32>
    %40 = arith.mulf %39, %38 : vector<8x128xf32>
    %41 = arith.subf %37, %40 : vector<8x128xf32>
    %42 = arith.mulf %41, %31 : vector<8x128xf32>
    %cst_20 = arith.constant dense<0.000000e+00> : vector<8xf32>
    %43 = vector.multi_reduction <add>, %42, %cst_20 [1] : vector<8x128xf32> to vector<8xf32>
    %44 = vector.shape_cast %43 : vector<8xf32> to vector<8x1xf32>
    %c0_21 = arith.constant 0 : index
    %c0_22 = arith.constant 0 : index
    %45 = vector.load %arg7[%c0_21, %c0_22] : memref<8x128xf32, #tpu.memory_space<vmem>>, vector<8x128xf32>
    %46 = arith.mulf %28, %45 : vector<8x128xf32>
    %47 = arith.addf %14, %46 : vector<8x128xf32>
    %c0_23 = arith.constant 0 : index
    %c0_24 = arith.constant 0 : index
    %48 = vector.load %arg12[%c0_23, %c0_24] : memref<8x128xf32, #tpu.memory_space<vmem>>, vector<8x128xf32>
    tpu.vector_store %arg12[%c0_23, %c0_24], %47 {strides = array<i32>} : memref<8x128xf32, #tpu.memory_space<vmem>>, vector<8x128xf32>,
    %c0_25 = arith.constant 0 : index
    %c0_26 = arith.constant 0 : index
    %49 = vector.load %arg4[%c0_25, %c0_26] : memref<8x3xf32, #tpu.memory_space<vmem>>, vector<8x3xf32>
    %cst_27 = arith.constant dense<0xFF800000> : vector<8xf32>
    %50 = vector.multi_reduction <maximumf>, %49, %cst_27 [1] : vector<8x3xf32> to vector<8xf32>
    %51 = vector.shape_cast %50 : vector<8xf32> to vector<8x1xf32>
    %52 = vector.broadcast %51 : vector<8x1xf32> to vector<8x3xf32>
    %53 = arith.subf %49, %52 : vector<8x3xf32>
    %54 = math.exp %53 : vector<8x3xf32>
    %cst_28 = arith.constant dense<0.000000e+00> : vector<8xf32>
    %55 = vector.multi_reduction <add>, %54, %cst_28 [1] : vector<8x3xf32> to vector<8xf32>
    %56 = vector.shape_cast %55 : vector<8xf32> to vector<8x1xf32>
    %57 = math.log %56 : vector<8x1xf32>
    %58 = arith.addf %51, %57 : vector<8x1xf32>
    %59 = vector.broadcast %58 : vector<8x1xf32> to vector<8x3xf32>
    %60 = arith.subf %49, %59 : vector<8x3xf32>
    %61 = math.exp %60 : vector<8x3xf32>
    %cst_29 = arith.constant 1.09861231 : f32
    %62 = vector.broadcast %cst_29 : f32 to vector<8x3xf32>
    %63 = arith.addf %60, %62 : vector<8x3xf32>
    %64 = arith.mulf %61, %63 : vector<8x3xf32>
    %cst_30 = arith.constant dense<0.000000e+00> : vector<8xf32>
    %65 = vector.multi_reduction <add>, %64, %cst_30 [1] : vector<8x3xf32> to vector<8xf32>
    %66 = vector.shape_cast %65 : vector<8xf32> to vector<8x1xf32>
    %c0_31 = arith.constant 0 : index
    %c0_32 = arith.constant 0 : index
    %67 = vector.load %arg6[%c0_31, %c0_32] : memref<8x128xf32, #tpu.memory_space<vmem>>, vector<8x128xf32>
    %c0_33 = arith.constant 0 : index
    %c0_34 = arith.constant 0 : index
    %68 = vector.load %arg5[%c0_33, %c0_34] : memref<8x128xf32, #tpu.memory_space<vmem>>, vector<8x128xf32>
    %69 = math.log %67 : vector<8x128xf32>
    %cst_35 = arith.constant 0.000000e+00 : f32
    %70 = vector.broadcast %cst_35 : f32 to vector<8x128xf32>
    %71 = arith.subf %70, %69 : vector<8x128xf32>
    %72 = arith.mulf %67, %67 : vector<8x128xf32>
    %73 = arith.subf %68, %8 : vector<8x128xf32>
    %74 = arith.mulf %73, %73 : vector<8x128xf32>
    %75 = arith.addf %72, %74 : vector<8x128xf32>
    %cst_36 = arith.constant 5.000000e-01 : f32
    %76 = vector.broadcast %cst_36 : f32 to vector<8x128xf32>
    %77 = arith.mulf %76, %75 : vector<8x128xf32>
    %78 = arith.addf %71, %77 : vector<8x128xf32>
    %cst_37 = arith.constant 5.000000e-01 : f32
    %79 = vector.broadcast %cst_37 : f32 to vector<8x128xf32>
    %80 = arith.subf %78, %79 : vector<8x128xf32>
    %cst_38 = arith.constant dense<0.000000e+00> : vector<8xf32>
    %81 = vector.multi_reduction <add>, %80, %cst_38 [1] : vector<8x128xf32> to vector<8xf32>
    %82 = vector.shape_cast %81 : vector<8xf32> to vector<8x1xf32>
    %83 = tpu.iota {dimensions = array<i32: 1>} : vector<8x128xi32>
    %c0_i32 = arith.constant 0 : i32
    %84 = vector.broadcast %c0_i32 : i32 to vector<8x128xi32>
    %85 = arith.cmpi eq, %83, %84 : vector<8x128xi32>
    %cst_39 = arith.constant 0.000000e+00 : f32
    %86 = vector.shape_cast %44 : vector<8x1xf32> to vector<8x1xf32>
    %87 = vector.broadcast %86 : vector<8x1xf32> to vector<8x128xf32>
    %88 = vector.broadcast %cst_39 : f32 to vector<8x128xf32>
    %89 = arith.select %85, %87, %88 : vector<8x128xi1>, vector<8x128xf32>
    %c1_i32 = arith.constant 1 : i32
    %90 = vector.broadcast %c1_i32 : i32 to vector<8x128xi32>
    %91 = arith.cmpi eq, %83, %90 : vector<8x128xi32>
    %cst_40 = arith.constant 0.000000e+00 : f32
    %92 = vector.shape_cast %66 : vector<8x1xf32> to vector<8x1xf32>
    %93 = vector.broadcast %92 : vector<8x1xf32> to vector<8x128xf32>
    %94 = vector.broadcast %cst_40 : f32 to vector<8x128xf32>
    %95 = arith.select %91, %93, %94 : vector<8x128xi1>, vector<8x128xf32>
    %96 = arith.addf %89, %95 : vector<8x128xf32>
    %c2_i32 = arith.constant 2 : i32
    %97 = vector.broadcast %c2_i32 : i32 to vector<8x128xi32>
    %98 = arith.cmpi eq, %83, %97 : vector<8x128xi32>
    %cst_41 = arith.constant 0.000000e+00 : f32
    %99 = vector.shape_cast %82 : vector<8x1xf32> to vector<8x1xf32>
    %100 = vector.broadcast %99 : vector<8x1xf32> to vector<8x128xf32>
    %101 = vector.broadcast %cst_41 : f32 to vector<8x128xf32>
    %102 = arith.select %98, %100, %101 : vector<8x128xi1>, vector<8x128xf32>
    %103 = arith.addf %96, %102 : vector<8x128xf32>
    %c0_42 = arith.constant 0 : index
    %c0_43 = arith.constant 0 : index
    %104 = vector.load %arg13[%c0_42, %c0_43] : memref<8x128xf32, #tpu.memory_space<vmem>>, vector<8x128xf32>
    tpu.vector_store %arg13[%c0_42, %c0_43], %103 {strides = array<i32>} : memref<8x128xf32, #tpu.memory_space<vmem>>, vector<8x128xf32>,
    return
  }
  func.func @transform_0(%arg0: i32) -> (i32, i32) {
    %c0_i32 = arith.constant 0 : i32
    %c0_i32_0 = arith.constant 0 : i32
    return %arg0, %c0_i32 : i32, i32
  }
  func.func @transform_1(%arg0: i32) -> (i32, i32) {
    %c0_i32 = arith.constant 0 : i32
    %c0_i32_0 = arith.constant 0 : i32
    return %arg0, %c0_i32 : i32, i32
  }
  func.func @transform_2(%arg0: i32) -> (i32, i32) {
    %c0_i32 = arith.constant 0 : i32
    %c0_i32_0 = arith.constant 0 : i32
    return %arg0, %c0_i32 : i32, i32
  }
  func.func @transform_3(%arg0: i32) -> (i32, i32) {
    %c0_i32 = arith.constant 0 : i32
    %c0_i32_0 = arith.constant 0 : i32
    return %arg0, %c0_i32 : i32, i32
  }
  func.func @transform_4(%arg0: i32) -> (i32, i32) {
    %c0_i32 = arith.constant 0 : i32
    %c0_i32_0 = arith.constant 0 : i32
    return %arg0, %c0_i32 : i32, i32
  }
  func.func @transform_5(%arg0: i32) -> (i32, i32) {
    %c0_i32 = arith.constant 0 : i32
    %c0_i32_0 = arith.constant 0 : i32
    return %arg0, %c0_i32 : i32, i32
  }
  func.func @transform_6(%arg0: i32) -> (i32, i32) {
    %c0_i32 = arith.constant 0 : i32
    %c0_i32_0 = arith.constant 0 : i32
    return %arg0, %c0_i32 : i32, i32
  }
  func.func @transform_7(%arg0: i32) -> (i32, i32) {
    %c0_i32 = arith.constant 0 : i32
    %c0_i32_0 = arith.constant 0 : i32
    %c0_i32_1 = arith.constant 0 : i32
    return %c0_i32, %c0_i32_0 : i32, i32
  }
  func.func @transform_8(%arg0: i32) -> (i32, i32) {
    %c0_i32 = arith.constant 0 : i32
    %c0_i32_0 = arith.constant 0 : i32
    %c0_i32_1 = arith.constant 0 : i32
    return %c0_i32, %c0_i32_0 : i32, i32
  }
  func.func @transform_9(%arg0: i32) -> (i32, i32) {
    %c0_i32 = arith.constant 0 : i32
    %c0_i32_0 = arith.constant 0 : i32
    %c0_i32_1 = arith.constant 0 : i32
    return %c0_i32, %c0_i32_0 : i32, i32
  }
  func.func @transform_10(%arg0: i32) -> (i32, i32) {
    %c0_i32 = arith.constant 0 : i32
    %c0_i32_0 = arith.constant 0 : i32
    %c0_i32_1 = arith.constant 0 : i32
    return %c0_i32, %c0_i32_0 : i32, i32
  }
  func.func @transform_11(%arg0: i32) -> (i32, i32) {
    %c0_i32 = arith.constant 0 : i32
    %c0_i32_0 = arith.constant 0 : i32
    return %arg0, %c0_i32 : i32, i32
  }
  func.func @transform_12(%arg0: i32) -> (i32, i32) {
    %c0_i32 = arith.constant 0 : i32
    %c0_i32_0 = arith.constant 0 : i32
    return %arg0, %c0_i32 : i32, i32
  }
}

</mosaic_0001>

<llo_original>
// kernel: tpu_custom_call.1
$region0: #{tpu_custom_call.1}
  #allocation0 [shape = 'u32[]', space=smem, size = 0x4, offset = 0x4, fixed_abs, tag = 'smem constant byte address 0x4 - core index']
  #allocation1 [shape = 'u32[144,128]{1,0:T(1,128)}', space=vmem, size = 0x12000, scoped, tag = 'internal scratch']
  %s0 = inlined_call_operand.vmem [shape: f32[8,128], index: 0, kind: input, shape index: {}]
  %s1 = inlined_call_operand.hbm [shape: f32[8,128], index: 1, kind: input, shape index: {}]
  %s2 = inlined_call_operand.hbm [shape: f32[8,7], index: 2, kind: input, shape index: {}]
  %s3 = inlined_call_operand.vmem [shape: f32[8,3], index: 3, kind: input, shape index: {}]
  %s4 = inlined_call_operand.hbm [shape: f32[8,128], index: 4, kind: input, shape index: {}]
  %s5 = inlined_call_operand.hbm [shape: f32[8,128], index: 5, kind: input, shape index: {}]
  %s6 = inlined_call_operand.hbm [shape: f32[8,128], index: 6, kind: input, shape index: {}]
  %s7 = inlined_call_operand.vmem [shape: f32[7,384], index: 7, kind: input, shape index: {}]
  %s8 = inlined_call_operand.vmem [shape: f32[1,128], index: 8, kind: input, shape index: {}]
  %s9 = inlined_call_operand.vmem [shape: f32[1,128], index: 9, kind: input, shape index: {}]
  %s10 = inlined_call_operand.vmem [shape: f32[1,128], index: 10, kind: input, shape index: {}]
  %s11 = inlined_call_operand.hbm [shape: f32[8,128], index: 11, kind: output, shape index: {0}]
  %s12 = inlined_call_operand.hbm [shape: f32[8,128], index: 12, kind: output, shape index: {1}]
  %13 = xla_tuple %s11, %s12
  %s14 = sld [smem:[#allocation0]]
  $region82: #{tpu_custom_call.1} parent=0
    _
  %s16 = ssub.s32 1, %s14
  %s17 = scalar_select 0, %s16, %s14
  $region1: #{tpu_custom_call.1} parent=0
    #allocation2 [shape = 'u8[4096]{0}', space=vmem, size = 0x1000, scoped, tag = 'input window, operand 1, single buffered']
    #allocation3 [shape = 's32[1]{0}', space=sflag, size = 0x4, scoped, tag = 'scoped memory for tpu_custom_call.1']
    #allocation4 [shape = 's32[1]{0}', space=sflag, size = 0x4, scoped, tag = 'scoped memory for tpu_custom_call.1']
    #allocation5 [shape = 'u8[4096]{0}', space=vmem, size = 0x1000, scoped, tag = 'input window, operand 2, single buffered']
    #allocation6 [shape = 's32[1]{0}', space=sflag, size = 0x4, scoped, tag = 'scoped memory for tpu_custom_call.1']
    #allocation7 [shape = 'u8[4096]{0}', space=vmem, size = 0x1000, scoped, tag = 'input window, operand 4, single buffered']
    #allocation8 [shape = 'u8[4096]{0}', space=vmem, size = 0x1000, scoped, tag = 'input window, operand 5, single buffered']
    #allocation9 [shape = 's32[1]{0}', space=sflag, size = 0x4, scoped, tag = 'scoped memory for tpu_custom_call.1']
    #allocation10 [shape = 'u8[4096]{0}', space=vmem, size = 0x1000, scoped, tag = 'input window, operand 6, single buffered']
    #allocation11 [shape = 'u8[4096]{0}', space=vmem, size = 0x1000, scoped, tag = 'output window, operand 0, single buffered']
    #allocation12 [shape = 'u8[4096]{0}', space=vmem, size = 0x1000, scoped, tag = 'output window, operand 1, single buffered']
    #allocation13 [shape = 's32[1]{0}', space=sflag, size = 0x4, scoped, tag = 'scoped memory for tpu_custom_call.1']
    %18 = vsyncpa [#allocation3], 0
    %19 = vsyncpa [#allocation6], 0
    %20 = vsyncpa [#allocation9], 0
    %21 = vsyncpa [#allocation4], 0
    %22 = vsyncpa [#allocation13], 0
    // Predicated region
    $region2: #{tpu_custom_call.1} parent=1 // pred_check
      _
    $region3: #{tpu_custom_call.1} parent=1 // pred_check_branch
      %24 = sbr.rel (0) target = $region5
    $region4: #{tpu_custom_call.1} parent=1 // pred_region
      _
    $region5: #{tpu_custom_call.1} parent=1 // pred_fallthru
      _
    // Predicated region
    $region6: #{tpu_custom_call.1} parent=1 // pred_check
      _
    $region7: #{tpu_custom_call.1} parent=1 // pred_check_branch
      %26 = sbr.rel (0) target = $region9
    $region8: #{tpu_custom_call.1} parent=1 // pred_region
      %s28 = ssub.s32 128, 128
      %29 = vsyncadd [#allocation3], %s28
      %s31 = sshll.u32 [#allocation2], 4
      %s32 = int_to_ptr.vmem [resolvable:$true] %s31
      %34 = dma.hbm_to_vmem [thread:$0]  %s1, 128, %s32, [#allocation3]
    $region9: #{tpu_custom_call.1} parent=1 // pred_fallthru
      _
    // Predicated region
    $region10: #{tpu_custom_call.1} parent=1 // pred_check
      _
    $region11: #{tpu_custom_call.1} parent=1 // pred_check_branch
      %36 = sbr.rel (0) target = $region13
    $region12: #{tpu_custom_call.1} parent=1 // pred_region
      %s38 = ssub.s32 128, 128
      %39 = vsyncadd [#allocation6], %s38
      %s41 = sshll.u32 [#allocation5], 4
      %s42 = int_to_ptr.vmem [resolvable:$true] %s41
      %44 = dma.hbm_to_vmem [thread:$0]  %s2, 128, %s42, [#allocation6]
    $region13: #{tpu_custom_call.1} parent=1 // pred_fallthru
      _
    // Predicated region
    $region14: #{tpu_custom_call.1} parent=1 // pred_check
      _
    $region15: #{tpu_custom_call.1} parent=1 // pred_check_branch
      %46 = sbr.rel (0) target = $region17
    $region16: #{tpu_custom_call.1} parent=1 // pred_region
      _
    $region17: #{tpu_custom_call.1} parent=1 // pred_fallthru
      _
    // Predicated region
    $region18: #{tpu_custom_call.1} parent=1 // pred_check
      _
    $region19: #{tpu_custom_call.1} parent=1 // pred_check_branch
      %48 = sbr.rel (0) target = $region21
    $region20: #{tpu_custom_call.1} parent=1 // pred_region
      %s50 = ssub.s32 128, 128
      %51 = vsyncadd [#allocation6], %s50
      %s53 = sshll.u32 [#allocation7], 4
      %s54 = int_to_ptr.vmem [resolvable:$true] %s53
      %56 = dma.hbm_to_vmem [thread:$0]  %s4, 128, %s54, [#allocation6]
    $region21: #{tpu_custom_call.1} parent=1 // pred_fallthru
      _
    // Predicated region
    $region22: #{tpu_custom_call.1} parent=1 // pred_check
      _
    $region23: #{tpu_custom_call.1} parent=1 // pred_check_branch
      %58 = sbr.rel (0) target = $region25
    $region24: #{tpu_custom_call.1} parent=1 // pred_region
      %s60 = ssub.s32 128, 128
      %61 = vsyncadd [#allocation9], %s60
      %s63 = sshll.u32 [#allocation8], 4
      %s64 = int_to_ptr.vmem [resolvable:$true] %s63
      %66 = dma.hbm_to_vmem [thread:$0]  %s5, 128, %s64, [#allocation9]
    $region25: #{tpu_custom_call.1} parent=1 // pred_fallthru
      _
    // Predicated region
    $region26: #{tpu_custom_call.1} parent=1 // pred_check
      _
    $region27: #{tpu_custom_call.1} parent=1 // pred_check_branch
      %68 = sbr.rel (0) target = $region29
    $region28: #{tpu_custom_call.1} parent=1 // pred_region
      %s70 = ssub.s32 128, 128
      %71 = vsyncadd [#allocation9], %s70
      %s73 = sshll.u32 [#allocation10], 4
      %s74 = int_to_ptr.vmem [resolvable:$true] %s73
      %76 = dma.hbm_to_vmem [thread:$0]  %s6, 128, %s74, [#allocation9]
    $region29: #{tpu_custom_call.1} parent=1 // pred_fallthru
      _
    // Predicated region
    $region30: #{tpu_custom_call.1} parent=1 // pred_check
      _
    $region31: #{tpu_custom_call.1} parent=1 // pred_check_branch
      %78 = sbr.rel (0) target = $region33
    $region32: #{tpu_custom_call.1} parent=1 // pred_region
      _
    $region33: #{tpu_custom_call.1} parent=1 // pred_fallthru
      _
    // Predicated region
    $region34: #{tpu_custom_call.1} parent=1 // pred_check
      _
    $region35: #{tpu_custom_call.1} parent=1 // pred_check_branch
      %80 = sbr.rel (0) target = $region37
    $region36: #{tpu_custom_call.1} parent=1 // pred_region
      _
    $region37: #{tpu_custom_call.1} parent=1 // pred_fallthru
      _
    // Predicated region
    $region38: #{tpu_custom_call.1} parent=1 // pred_check
      _
    $region39: #{tpu_custom_call.1} parent=1 // pred_check_branch
      %82 = sbr.rel (0) target = $region41
    $region40: #{tpu_custom_call.1} parent=1 // pred_region
      _
    $region41: #{tpu_custom_call.1} parent=1 // pred_fallthru
      _
    // Predicated region
    $region42: #{tpu_custom_call.1} parent=1 // pred_check
      _
    $region43: #{tpu_custom_call.1} parent=1 // pred_check_branch
      %84 = sbr.rel (0) target = $region45
    $region44: #{tpu_custom_call.1} parent=1 // pred_region
      _
    $region45: #{tpu_custom_call.1} parent=1 // pred_fallthru
      _
    // Predicated region
    $region46: #{tpu_custom_call.1} parent=1 // pred_check
      _
    $region47: #{tpu_custom_call.1} parent=1 // pred_check_branch
      %86 = sbr.rel (0) target = $region49
    $region48: #{tpu_custom_call.1} parent=1 // pred_region
      %87 = dma.done [#allocation3], 128
    $region49: #{tpu_custom_call.1} parent=1 // pred_fallthru
      _
    // Predicated region
    $region50: #{tpu_custom_call.1} parent=1 // pred_check
      _
    $region51: #{tpu_custom_call.1} parent=1 // pred_check_branch
      %89 = sbr.rel (0) target = $region53
    $region52: #{tpu_custom_call.1} parent=1 // pred_region
      %90 = dma.done [#allocation6], 128
    $region53: #{tpu_custom_call.1} parent=1 // pred_fallthru
      _
    // Predicated region
    $region54: #{tpu_custom_call.1} parent=1 // pred_check
      _
    $region55: #{tpu_custom_call.1} parent=1 // pred_check_branch
      %92 = sbr.rel (0) target = $region57
    $region56: #{tpu_custom_call.1} parent=1 // pred_region
      %93 = dma.done [#allocation6], 128
    $region57: #{tpu_custom_call.1} parent=1 // pred_fallthru
      _
    // Predicated region
    $region58: #{tpu_custom_call.1} parent=1 // pred_check
      _
    $region59: #{tpu_custom_call.1} parent=1 // pred_check_branch
      %95 = sbr.rel (0) target = $region61
    $region60: #{tpu_custom_call.1} parent=1 // pred_region
      %96 = dma.done [#allocation9], 128
    $region61: #{tpu_custom_call.1} parent=1 // pred_fallthru
      _
    // Predicated region
    $region62: #{tpu_custom_call.1} parent=1 // pred_check
      _
    $region63: #{tpu_custom_call.1} parent=1 // pred_check_branch
      %98 = sbr.rel (0) target = $region65
    $region64: #{tpu_custom_call.1} parent=1 // pred_region
      %99 = dma.done [#allocation9], 128
    $region65: #{tpu_custom_call.1} parent=1 // pred_fallthru
      _
    %v100 = vld [vmem:[#allocation5] sm:$0xff]
    %v101 = vld [vmem:[%s7] sm:$0x7f]
    %v102 = vld [vmem:[%s7 + $0x8] sm:$0x7f]
    %v103 = vld [vmem:[%s7 + $0x10] sm:$0x7f]
    %vm104 = vcmask 56320
    %v106 = vsel %vm104, %v100, 0
    %vm108 = vcmask 1046528
    %v110 = vsel %vm108, %v101, 0
    %v113 = vsel %vm108, %v102, 0
    %v116 = vsel %vm108, %v103, 0
    %118 = vmatprep.subr.mxu0 %v113
    %119 = vmatpush1.msra.mxu0 %v110
    %120 = vmatprep.subr.mxu0 0.0
    %121 = vmatpush1.msra.mxu0 0.0
    %122 = vmatprep.subr.mxu0 0.0
    %123 = vmatpush1.msra.mxu0 0.0
    %124 = vmatprep.subr.mxu0 0.0
    %125 = vmatpush1.msra.mxu0 0.0
    %126 = vmatprep.subr.mxu0 0.0
    %127 = vmatpush1.msra.mxu0 0.0
    %128 = vmatprep.subr.mxu0 0.0
    %129 = vmatpush1.msra.mxu0 0.0
    %130 = vmatprep.subr.mxu0 0.0
    %131 = vmatpush1.msra.mxu0 0.0
    %132 = vmatprep.subr.mxu0 0.0
    %133 = vmatpush1.msra.mxu0 0.0
    %134 = vmatprep.subr.mxu0 0.0
    %135 = vmatpush1.msra.mxu0 0.0
    %136 = vmatprep.subr.mxu0 0.0
    %137 = vmatpush1.msra.mxu0 0.0
    %138 = vmatprep.subr.mxu0 0.0
    %139 = vmatpush1.msra.mxu0 0.0
    %140 = vmatprep.subr.mxu0 0.0
    %141 = vmatpush1.msra.mxu0 0.0
    %142 = vmatprep.subr.mxu0 0.0
    %143 = vmatpush1.msra.mxu0 0.0
    %144 = vmatprep.subr.mxu0 0.0
    %145 = vmatpush1.msra.mxu0 0.0
    %146 = vmatprep.subr.mxu0 0.0
    %147 = vmatpush1.msra.mxu0 0.0
    %148 = vmatprep.subr.mxu0 0.0
    %149 = vmatpush1.msra.mxu0 0.0
    %150 = vmatprep.subr.mxu0 0.0
    %151 = vmatpush1.msra.mxu0 0.0
    %152 = vmatprep.subr.mxu0 0.0
    %153 = vmatpush1.msra.mxu0 0.0
    %154 = vmatprep.subr.mxu0 0.0
    %155 = vmatpush1.msra.mxu0 0.0
    %156 = vmatprep.subr.mxu0 0.0
    %157 = vmatpush1.msra.mxu0 0.0
    %158 = vmatprep.subr.mxu0 0.0
    %159 = vmatpush1.msra.mxu0 0.0
    %160 = vmatprep.subr.mxu0 0.0
    %161 = vmatpush1.msra.mxu0 0.0
    %162 = vmatprep.subr.mxu0 0.0
    %163 = vmatpush1.msra.mxu0 0.0
    %164 = vmatprep.subr.mxu0 0.0
    %165 = vmatpush1.msra.mxu0 0.0
    %166 = vmatprep.subr.mxu0 0.0
    %167 = vmatpush1.msra.mxu0 0.0
    %168 = vmatprep.subr.mxu0 0.0
    %169 = vmatpush1.msra.mxu0 0.0
    %170 = vmatprep.subr.mxu0 0.0
    %171 = vmatpush1.msra.mxu0 0.0
    %172 = vmatprep.subr.mxu0 0.0
    %173 = vmatpush1.msra.mxu0 0.0
    %174 = vmatprep.subr.mxu0 0.0
    %175 = vmatpush1.msra.mxu0 0.0
    %176 = vmatprep.subr.mxu0 0.0
    %177 = vmatpush1.msra.mxu0 0.0
    %178 = vmatprep.subr.mxu0 0.0
    %179 = vmatpush1.msra.mxu0 0.0
    %180 = vmatprep.subr.mxu0 0.0
    %181 = vmatpush1.msra.mxu0 0.0
    %182 = vmatprep.mubr.f32.mxu0 0.0
    %183 = vmatmul.mubr.f32.gmra.mrb[0].mxu0 %v106
    %v184 = vpop.f32.mrb[0].mxu0
    %v185 = vadd.f32 0.0, %v184
    %v186 = vpop.f32.mrb[0].mxu0
    %v187 = vadd.f32 0.0, %v186
    %188 = vdwg.mxu0
    %189 = vmatprep.subr.mxu0 0.0
    %190 = vmatpush1.msra.mxu0 %v116
    %191 = vmatprep.subr.mxu0 0.0
    %192 = vmatpush1.msra.mxu0 0.0
    %193 = vmatprep.subr.mxu0 0.0
    %194 = vmatpush1.msra.mxu0 0.0
    %195 = vmatprep.subr.mxu0 0.0
    %196 = vmatpush1.msra.mxu0 0.0
    %197 = vmatprep.subr.mxu0 0.0
    %198 = vmatpush1.msra.mxu0 0.0
    %199 = vmatprep.subr.mxu0 0.0
    %200 = vmatpush1.msra.mxu0 0.0
    %201 = vmatprep.subr.mxu0 0.0
    %202 = vmatpush1.msra.mxu0 0.0
    %203 = vmatprep.subr.mxu0 0.0
    %204 = vmatpush1.msra.mxu0 0.0
    %205 = vmatprep.subr.mxu0 0.0
    %206 = vmatpush1.msra.mxu0 0.0
    %207 = vmatprep.subr.mxu0 0.0
    %208 = vmatpush1.msra.mxu0 0.0
    %209 = vmatprep.subr.mxu0 0.0
    %210 = vmatpush1.msra.mxu0 0.0
    %211 = vmatprep.subr.mxu0 0.0
    %212 = vmatpush1.msra.mxu0 0.0
    %213 = vmatprep.subr.mxu0 0.0
    %214 = vmatpush1.msra.mxu0 0.0
    %215 = vmatprep.subr.mxu0 0.0
    %216 = vmatpush1.msra.mxu0 0.0
    %217 = vmatprep.subr.mxu0 0.0
    %218 = vmatpush1.msra.mxu0 0.0
    %219 = vmatprep.subr.mxu0 0.0
    %220 = vmatpush1.msra.mxu0 0.0
    %221 = vmatprep.subr.mxu0 0.0
    %222 = vmatpush1.msra.mxu0 0.0
    %223 = vmatprep.subr.mxu0 0.0
    %224 = vmatpush1.msra.mxu0 0.0
    %225 = vmatprep.subr.mxu0 0.0
    %226 = vmatpush1.msra.mxu0 0.0
    %227 = vmatprep.subr.mxu0 0.0
    %228 = vmatpush1.msra.mxu0 0.0
    %229 = vmatprep.subr.mxu0 0.0
    %230 = vmatpush1.msra.mxu0 0.0
    %231 = vmatprep.subr.mxu0 0.0
    %232 = vmatpush1.msra.mxu0 0.0
    %233 = vmatprep.subr.mxu0 0.0
    %234 = vmatpush1.msra.mxu0 0.0
    %235 = vmatprep.subr.mxu0 0.0
    %236 = vmatpush1.msra.mxu0 0.0
    %237 = vmatprep.subr.mxu0 0.0
    %238 = vmatpush1.msra.mxu0 0.0
    %239 = vmatprep.subr.mxu0 0.0
    %240 = vmatpush1.msra.mxu0 0.0
    %241 = vmatprep.subr.mxu0 0.0
    %242 = vmatpush1.msra.mxu0 0.0
    %243 = vmatprep.subr.mxu0 0.0
    %244 = vmatpush1.msra.mxu0 0.0
    %245 = vmatprep.subr.mxu0 0.0
    %246 = vmatpush1.msra.mxu0 0.0
    %247 = vmatprep.subr.mxu0 0.0
    %248 = vmatpush1.msra.mxu0 0.0
    %249 = vmatprep.subr.mxu0 0.0
    %250 = vmatpush1.msra.mxu0 0.0
    %251 = vmatprep.subr.mxu0 0.0
    %252 = vmatpush1.msra.mxu0 0.0
    %253 = vmatprep.mubr.f32.mxu0 0.0
    %254 = vmatmul.mubr.f32.gmra.mrb[0].mxu0 %v106
    %v255 = vpop.f32.mrb[0].mxu0
    %v256 = vadd.f32 0.0, %v255
    %v257 = vpop.f32.mrb[0].mxu0
    %258 = vdwg.mxu0
    %v259 = vld [vmem:[%s8] sm:$0x1]
    %v261 = vlaneseq
    %v262 = vshrl.u32 %v261, 7
    %v263 = vsub.s32 0, %v262
    %v264 = vrot.slane %v259, %v263
    %v266 = vadd.f32 %v256, %v264
    %v267 = vld [vmem:[%s9] sm:$0x1]
    %v268 = vld [vmem:[%s10] sm:$0x1]
    %v270 = vlaneseq
    %v271 = vshrl.u32 %v270, 7
    %v272 = vsub.s32 0, %v271
    %v273 = vrot.slane %v268, %v272
    %v275 = vmul.f32 %v185, %v273
    %v277 = vlaneseq
    %v278 = vshrl.u32 %v277, 7
    %v279 = vsub.s32 0, %v278
    %v280 = vrot.slane %v267, %v279
    %v282 = vadd.f32 %v275, %v280
    %v283 = vmax.f32 %v187, 0.0
    %v284 = vand.u32 2147483647, %v187
    %v285 = vsub.f32 0.0, %v284
    %v286 = vmul.f32 %v285, 1.442695
    %v287 = vpow.pop %v286
    %v288 = vadd.f32 %v287, 1.0
    %v289 = vlog2.pop %v288
    %v290 = vmul.f32 %v289, 0.6931472
    %v291 = vadd.f32 %v283, %v290
    %v292 = vmul.f32 %v291, %v273
    %v293 = vmax.f32 %v292, 1e-06
    %v294 = vrcp.pop %v293
    %v295 = vld [vmem:[%s0] sm:$0xff]
    %v296 = vld [vmem:[#allocation2] sm:$0xff]
    %v297 = vsub.f32 %v295, %v282
    %v298 = vmul.f32 %v297, %v294
    %v299 = vlog2.pop %v294
    %v300 = vmul.f32 %v299, 0.6931472
    %v301 = vsub.f32 %v300, 0.9189385
    %v302 = vmul.f32 %v298, %v298
    %v303 = vmul.f32 %v302, 0.5
    %v304 = vsub.f32 %v301, %v303
    %v305 = vmul.f32 %v304, %v296
    %306 = vadd.xlane.f32.xlu0 %v305
    %v307 = vpop.xlane.xlu0 %306
    %v308 = vld [vmem:[#allocation10] sm:$0xff]
    %v309 = vmul.f32 %v293, %v308
    %v310 = vadd.f32 %v282, %v309
    %311 = vst [vmem:[#allocation11] sm:$0xff] %v310
    %v312 = vld [vmem:[%s3] sm:$0xff]
    %vm313 = vcmask 23552
    %v314 = vsel %vm313, %v312, -inf
    %315 = vmax.xlane.f32.xlu0 %v314
    %v316 = vpop.xlane.xlu0 %315
    %v317 = vsub.f32 %v312, %v316
    %v318 = vmul.f32 %v317, 1.442695
    %v319 = vpow.pop %v318
    %v320 = vsel %vm313, %v319, 0.0
    %321 = vadd.xlane.f32.xlu0 %v320
    %v322 = vpop.xlane.xlu0 %321
    %v323 = vlog2.pop %v322
    %v324 = vmul.f32 %v323, 0.6931472
    %v325 = vadd.f32 %v316, %v324
    %v326 = vsub.f32 %v312, %v325
    %v327 = vmul.f32 %v326, 1.442695
    %v328 = vpow.pop %v327
    %v329 = vadd.f32 %v326, 1.0986123
    %v330 = vmul.f32 %v328, %v329
    %v331 = vsel %vm313, %v330, 0.0
    %332 = vadd.xlane.f32.xlu0 %v331
    %v333 = vpop.xlane.xlu0 %332
    %v334 = vld [vmem:[#allocation8] sm:$0xff]
    %v335 = vld [vmem:[#allocation7] sm:$0xff]
    %v336 = vlog2.pop %v334
    %v337 = vmul.f32 %v336, 0.6931472
    %v338 = vsub.f32 0.0, %v337
    %v339 = vmul.f32 %v334, %v334
    %v340 = vsub.f32 %v335, %v266
    %v341 = vmul.f32 %v340, %v340
    %v342 = vadd.f32 %v339, %v341
    %v343 = vmul.f32 %v342, 0.5
    %v344 = vadd.f32 %v338, %v343
    %v345 = vsub.f32 %v344, 0.5
    %346 = vadd.xlane.f32.xlu0 %v345
    %v347 = vpop.xlane.xlu0 %346
    %v348 = vlaneseq
    %v349 = vand.u32 %v348, 127
    %vm350 = vcmp.eq.s32.totalorder %v349, 0
    %v351 = vsel %vm350, %v307, 0.0
    %vm352 = vcmp.eq.s32.totalorder %v349, 1
    %v353 = vsel %vm352, %v333, 0.0
    %v354 = vadd.f32 %v351, %v353
    %vm355 = vcmp.eq.s32.totalorder %v349, 2
    %v356 = vsel %vm355, %v347, 0.0
    %v357 = vadd.f32 %v354, %v356
    %358 = vst [vmem:[#allocation12] sm:$0xff] %v357
    // Predicated region
    $region66: #{tpu_custom_call.1} parent=1 // pred_check
      _
    $region67: #{tpu_custom_call.1} parent=1 // pred_check_branch
      %360 = sbr.rel (0) target = $region69
    $region68: #{tpu_custom_call.1} parent=1 // pred_region
      %s362 = ssub.s32 128, 128
      %363 = vsyncadd [#allocation4], %s362
      %s365 = sshll.u32 [#allocation11], 4
      %s366 = int_to_ptr.vmem [resolvable:$true] %s365
      %368 = dma.vmem_to_hbm [thread:$0]  %s366, 128, %s11, [#allocation4]
    $region69: #{tpu_custom_call.1} parent=1 // pred_fallthru
      _
    // Predicated region
    $region70: #{tpu_custom_call.1} parent=1 // pred_check
      _
    $region71: #{tpu_custom_call.1} parent=1 // pred_check_branch
      %370 = sbr.rel (0) target = $region73
    $region72: #{tpu_custom_call.1} parent=1 // pred_region
      %s372 = ssub.s32 128, 128
      %373 = vsyncadd [#allocation13], %s372
      %s375 = sshll.u32 [#allocation12], 4
      %s376 = int_to_ptr.vmem [resolvable:$true] %s375
      %378 = dma.vmem_to_hbm [thread:$0]  %s376, 128, %s12, [#allocation13]
    $region73: #{tpu_custom_call.1} parent=1 // pred_fallthru
      _
    // Predicated region
    $region74: #{tpu_custom_call.1} parent=1 // pred_check
      _
    $region75: #{tpu_custom_call.1} parent=1 // pred_check_branch
      %380 = sbr.rel (0) target = $region77
    $region76: #{tpu_custom_call.1} parent=1 // pred_region
      %381 = dma.done [#allocation4], 128
    $region77: #{tpu_custom_call.1} parent=1 // pred_fallthru
      _
    // Predicated region
    $region78: #{tpu_custom_call.1} parent=1 // pred_check
      _
    $region79: #{tpu_custom_call.1} parent=1 // pred_check_branch
      %383 = sbr.rel (0) target = $region81
    $region80: #{tpu_custom_call.1} parent=1 // pred_region
      %384 = dma.done [#allocation13], 128
    $region81: #{tpu_custom_call.1} parent=1 // pred_fallthru
      _
    %385 = vsyncpa [#allocation3], 1
    %386 = vsyncpa [#allocation6], 1
    %387 = vsyncpa [#allocation9], 1
    %388 = vsyncpa [#allocation4], 1
    %389 = vsyncpa [#allocation13], 1

</llo_original>
